<compile_context>
chip_gen: v7x
topology: tpu7x:2x2x1
jax: 0.10.0
libtpu: 0.0.40
codegen_flags: <defaults>
</compile_context>

<pallas_src>
import jax
import jax.numpy as jnp
from jax.experimental import pallas as pl
from jax.experimental.pallas import tpu as pltpu

EPS = 1e-5
SEQ_LEN = 4


def lstm_module_kernel(x_ref, bn_ref, wih_ref, whh_ref, b_ref, wout_ref, bout_ref,
                       out_ref):
    # x_ref: (T, B, D) float32, time-major so per-timestep slices are leading-axis views.
    x = x_ref[...]
    T, B, D = x.shape
    H = whh_ref.shape[0]

    # ---- BatchNorm1d: single-pass training-mode batch stats (biased var) over T*B rows ----
    x_flat = x.reshape(T * B, D)                            # (N, D)
    inv_n = 1.0 / float(T * B)
    s1 = jnp.sum(x_flat, axis=0, keepdims=True)             # (1, D)
    s2 = jnp.sum(x_flat * x_flat, axis=0, keepdims=True)    # (1, D)
    mean = s1 * inv_n
    var = s2 * inv_n - mean * mean                          # biased variance
    gamma = bn_ref[0:1, :]                                  # (1, D)
    beta = bn_ref[1:2, :]                                   # (1, D)
    scale = gamma * jax.lax.rsqrt(var + EPS)                # fold gamma into the scale
    shift = beta - mean * scale
    xn = x_flat * scale + shift                             # (N, D) float32

    # ---- input projection for all timesteps at once (off the serial h->h chain) ----
    w_ih = wih_ref[...]                                     # (D, 4H) bf16
    w_hh = whh_ref[...]                                     # (H, 4H) bf16 (read once)
    bias = b_ref[...]                                       # (1, 4H) f32
    xproj = jnp.dot(xn.astype(w_ih.dtype), w_ih,
                    preferred_element_type=jnp.float32) + bias   # (N, 4H) f32
    xproj = xproj.reshape(T, B, 4 * H)

    # ---- single-layer LSTM, unrolled over T timesteps; PyTorch gate order (i, f, g, o) ----
    h = jnp.zeros((B, H), jnp.float32)
    c = jnp.zeros((B, H), jnp.float32)
    for t in range(T):
        gates = xproj[t] + jnp.dot(h.astype(w_hh.dtype), w_hh,
                                   preferred_element_type=jnp.float32)   # (B, 4H)
        i_g = jax.nn.sigmoid(gates[:, 0 * H:1 * H])
        f_g = jax.nn.sigmoid(gates[:, 1 * H:2 * H])
        g_g = jnp.tanh(gates[:, 2 * H:3 * H])
        o_g = jax.nn.sigmoid(gates[:, 3 * H:4 * H])
        c = f_g * c + i_g * g_g
        h = o_g * jnp.tanh(c)

    # ---- final Linear on the last hidden state (lane-padded to a 128-wide dense store) ----
    out = jnp.dot(h, wout_ref[...], preferred_element_type=jnp.float32) + bout_ref[...]
    out_ref[...] = out.astype(out_ref.dtype)


def lstm_module_forward(x, params):
    """x: (N, D) float32 with N % 4 == 0. Returns (N // 4, output_dim)."""
    N, D = x.shape
    assert N % SEQ_LEN == 0
    B = N // SEQ_LEN
    H = params["whh"].shape[0]
    O = params["out_dim"]
    OP = params["wout_p"].shape[1]

    # (N, D) -> (B, T, D) (the PyTorch view) -> (T, B, D) time-major for the kernel.
    x3 = x.astype(jnp.float32).reshape(B, SEQ_LEN, D).transpose(1, 0, 2)

    inputs = [
        x3,                     # (T, B, D) f32
        params["bn"],           # (2, D) f32: row 0 = gamma, row 1 = beta
        params["wih"],          # (D, 4H) bf16
        params["whh"],          # (H, 4H) bf16
        params["b"],            # (1, 4H) f32
        params["wout_p"],       # (H, OP) f32, zero-padded lanes
        params["bout_p"],       # (1, OP) f32
    ]

    flops = (2 * N * D * 4 * H              # input projection
             + 2 * SEQ_LEN * B * H * 4 * H  # recurrent matmuls
             + 2 * B * H * OP               # output Linear
             + 6 * N * D)                   # batchnorm
    transcendentals = 5 * SEQ_LEN * B * H
    bytes_accessed = int(4 * (x3.size + B * OP)
                         + sum(int(p.size) * p.dtype.itemsize for p in inputs[1:]))

    out_p = pl.pallas_call(
        lstm_module_kernel,
        out_shape=jax.ShapeDtypeStruct((B, OP), jnp.float32),
        in_specs=[pl.BlockSpec(memory_space=pltpu.MemorySpace.VMEM)] * len(inputs),
        out_specs=pl.BlockSpec(memory_space=pltpu.MemorySpace.VMEM),
        cost_estimate=pl.CostEstimate(flops=flops,
                                      transcendentals=transcendentals,
                                      bytes_accessed=bytes_accessed),
    )(*inputs)
    return out_p[:, :O]


def init_params(key, input_dim, hidden_dim, output_dim):
    """Deterministic synthetic parameters with PyTorch-default-style init scales."""
    ks = jax.random.split(key, 8)
    H = hidden_dim
    k_lstm = 1.0 / jnp.sqrt(hidden_dim)
    k_lin = 1.0 / jnp.sqrt(hidden_dim)

    # PyTorch LSTM packing: weight_ih_l0 (4H, D), weight_hh_l0 (4H, H), biases (4H,),
    # gate order i|f|g|o. Transposing keeps the same gate order along the columns.
    w_ih = jax.random.uniform(ks[0], (4 * H, input_dim), jnp.float32, -k_lstm, k_lstm)
    w_hh = jax.random.uniform(ks[1], (4 * H, hidden_dim), jnp.float32, -k_lstm, k_lstm)
    b_ih = jax.random.uniform(ks[2], (4 * H,), jnp.float32, -k_lstm, k_lstm)
    b_hh = jax.random.uniform(ks[3], (4 * H,), jnp.float32, -k_lstm, k_lstm)

    gamma = 1.0 + 0.1 * jax.random.normal(ks[4], (input_dim,), jnp.float32)
    beta = 0.1 * jax.random.normal(ks[5], (input_dim,), jnp.float32)

    w_out = jax.random.uniform(ks[6], (hidden_dim, output_dim), jnp.float32, -k_lin, k_lin)
    b_out = jax.random.uniform(ks[7], (output_dim,), jnp.float32, -k_lin, k_lin)

    OP = ((output_dim + 127) // 128) * 128                   # lane-dense output width
    wout_p = jnp.zeros((hidden_dim, OP), jnp.float32).at[:, :output_dim].set(w_out)
    bout_p = jnp.zeros((1, OP), jnp.float32).at[0, :output_dim].set(b_out)

    return {
        "bn": jnp.stack([gamma, beta], axis=0),              # (2, D)
        "wih": w_ih.T.astype(jnp.bfloat16),                  # (D, 4H)
        "whh": w_hh.T.astype(jnp.bfloat16),                  # (H, 4H)
        "b": (b_ih + b_hh).reshape(1, 4 * H),                # (1, 4H)
        "wout_p": wout_p,                                    # (H, OP)
        "bout_p": bout_p,                                    # (1, OP)
        "out_dim": output_dim,
    }


def lstm_module_reference(x, params):
    """Pure-JAX (f32) reference of the same forward pass, using the packed params."""
    N, D = x.shape
    B = N // SEQ_LEN
    H = params["whh"].shape[0]
    O = params["out_dim"]
    gamma = params["bn"][0]
    beta = params["bn"][1]
    mean = jnp.mean(x, axis=0, keepdims=True)
    var = jnp.mean((x - mean) ** 2, axis=0, keepdims=True)
    xn = (x - mean) / jnp.sqrt(var + EPS) * gamma[None, :] + beta[None, :]
    xn = xn.reshape(B, SEQ_LEN, D)

    w_ih = params["wih"].astype(jnp.float32)
    w_hh = params["whh"].astype(jnp.float32)
    b = params["b"]
    h = jnp.zeros((B, H), jnp.float32)
    c = jnp.zeros((B, H), jnp.float32)
    for t in range(SEQ_LEN):
        gates = xn[:, t, :] @ w_ih + h @ w_hh + b
        i_g = jax.nn.sigmoid(gates[:, 0 * H:1 * H])
        f_g = jax.nn.sigmoid(gates[:, 1 * H:2 * H])
        g_g = jnp.tanh(gates[:, 2 * H:3 * H])
        o_g = jax.nn.sigmoid(gates[:, 3 * H:4 * H])
        c = f_g * c + i_g * g_g
        h = o_g * jnp.tanh(c)
    return h @ params["wout_p"][:, :O] + params["bout_p"][0, :O]


if __name__ == "__main__":
    # TODO(synk): checkpoint save/load (torch.save / torch.load of lstm.pth) is file I/O
    # with no kernel equivalent; parameters are generated deterministically instead.
    input_dim, hidden_dim, output_dim = 16, 32, 8
    N = 32  # 32 rows -> view(-1, 4, 16) -> 8 sequences of length 4

    key = jax.random.PRNGKey(0)
    kx, kp = jax.random.split(key)
    x = jax.random.normal(kx, (N, input_dim), jnp.float32)
    params = init_params(kp, input_dim, hidden_dim, output_dim)

    out = lstm_module_forward(x, params)
    out = jax.block_until_ready(out)
    assert out.shape == (N // SEQ_LEN, output_dim), out.shape

    ref = lstm_module_reference(x, params)
    assert jnp.allclose(out, ref, atol=1e-2, rtol=1e-2), (out, ref)

    print("KERNEL_OK")
</pallas_src>

<mosaic_0001>
module attributes {stable_mosaic.version = 11 : i64} {
  func.func @lstm_module_kernel(%arg0: memref<4x8x16xf32, #tpu.memory_space<vmem>>, %arg1: memref<2x16xf32, #tpu.memory_space<vmem>>, %arg2: memref<16x128xbf16, #tpu.memory_space<vmem>>, %arg3: memref<32x128xbf16, #tpu.memory_space<vmem>>, %arg4: memref<1x128xf32, #tpu.memory_space<vmem>>, %arg5: memref<32x128xf32, #tpu.memory_space<vmem>>, %arg6: memref<1x128xf32, #tpu.memory_space<vmem>>, %arg7: memref<8x128xf32, #tpu.memory_space<vmem>>) attributes {dimension_semantics = [], scalar_prefetch = 0 : i64, scratch_operands = 0 : i64, tpu.core_type = #tpu.core_type<tc>} {
    %c0 = arith.constant 0 : index
    %c0_0 = arith.constant 0 : index
    %c0_1 = arith.constant 0 : index
    %0 = vector.load %arg0[%c0, %c0_0, %c0_1] : memref<4x8x16xf32, #tpu.memory_space<vmem>>, vector<4x8x16xf32>
    %1 = vector.shape_cast %0 : vector<4x8x16xf32> to vector<32x16xf32>
    %cst = arith.constant dense<0.000000e+00> : vector<16xf32>
    %2 = vector.multi_reduction <add>, %1, %cst [0] : vector<32x16xf32> to vector<16xf32>
    %3 = vector.shape_cast %2 : vector<16xf32> to vector<1x16xf32>
    %4 = arith.mulf %1, %1 : vector<32x16xf32>
    %cst_2 = arith.constant dense<0.000000e+00> : vector<16xf32>
    %5 = vector.multi_reduction <add>, %4, %cst_2 [0] : vector<32x16xf32> to vector<16xf32>
    %6 = vector.shape_cast %5 : vector<16xf32> to vector<1x16xf32>
    %cst_3 = arith.constant 3.125000e-02 : f32
    %7 = vector.broadcast %cst_3 : f32 to vector<1x16xf32>
    %8 = arith.mulf %3, %7 : vector<1x16xf32>
    %cst_4 = arith.constant 3.125000e-02 : f32
    %9 = vector.broadcast %cst_4 : f32 to vector<1x16xf32>
    %10 = arith.mulf %6, %9 : vector<1x16xf32>
    %11 = arith.mulf %8, %8 : vector<1x16xf32>
    %12 = arith.subf %10, %11 : vector<1x16xf32>
    %c0_5 = arith.constant 0 : index
    %c0_6 = arith.constant 0 : index
    %13 = vector.load %arg1[%c0_5, %c0_6] : memref<2x16xf32, #tpu.memory_space<vmem>>, vector<1x16xf32>
    %c1 = arith.constant 1 : index
    %c0_7 = arith.constant 0 : index
    %14 = vector.load %arg1[%c1, %c0_7] : memref<2x16xf32, #tpu.memory_space<vmem>>, vector<1x16xf32>
    %cst_8 = arith.constant 9.99999974E-6 : f32
    %15 = vector.broadcast %cst_8 : f32 to vector<1x16xf32>
    %16 = arith.addf %12, %15 : vector<1x16xf32>
    %17 = math.rsqrt %16 : vector<1x16xf32>
    %18 = arith.mulf %13, %17 : vector<1x16xf32>
    %19 = arith.mulf %8, %18 : vector<1x16xf32>
    %20 = arith.subf %14, %19 : vector<1x16xf32>
    %21 = vector.broadcast %18 : vector<1x16xf32> to vector<32x16xf32>
    %22 = arith.mulf %1, %21 : vector<32x16xf32>
    %23 = vector.broadcast %20 : vector<1x16xf32> to vector<32x16xf32>
    %24 = arith.addf %22, %23 : vector<32x16xf32>
    %c0_9 = arith.constant 0 : index
    %c0_10 = arith.constant 0 : index
    %25 = vector.load %arg2[%c0_9, %c0_10] : memref<16x128xbf16, #tpu.memory_space<vmem>>, vector<16x128xbf16>
    %c0_11 = arith.constant 0 : index
    %c0_12 = arith.constant 0 : index
    %26 = vector.load %arg3[%c0_11, %c0_12] : memref<32x128xbf16, #tpu.memory_space<vmem>>, vector<32x128xbf16>
    %c0_13 = arith.constant 0 : index
    %c0_14 = arith.constant 0 : index
    %27 = vector.load %arg4[%c0_13, %c0_14] : memref<1x128xf32, #tpu.memory_space<vmem>>, vector<1x128xf32>
    %28 = arith.truncf %24 : vector<32x16xf32> to vector<32x16xbf16>
    %cst_15 = arith.constant dense<0.000000e+00> : vector<32x128xf32>
    %29 = tpu.matmul %28, %25, %cst_15 {dimension_numbers = #tpu.dot_dimension_numbers<[1], [0], [0], [1], [0, 0, 1, 1], [], []>} : vector<32x16xbf16>, vector<16x128xbf16>, vector<32x128xf32> -> vector<32x128xf32>
    %30 = vector.broadcast %27 : vector<1x128xf32> to vector<32x128xf32>
    %31 = arith.addf %29, %30 : vector<32x128xf32>
    %32 = vector.shape_cast %31 : vector<32x128xf32> to vector<4x8x128xf32>
    %cst_16 = arith.constant 0.000000e+00 : f32
    %33 = vector.broadcast %cst_16 : f32 to vector<8x32xf32>
    %cst_17 = arith.constant 0.000000e+00 : f32
    %34 = vector.broadcast %cst_17 : f32 to vector<8x32xf32>
    %35 = vector.extract_strided_slice %32 {offsets = [0, 0, 0], sizes = [1, 8, 128], strides = [1, 1, 1]} : vector<4x8x128xf32> to vector<1x8x128xf32>
    %36 = vector.shape_cast %35 : vector<1x8x128xf32> to vector<8x128xf32>
    %37 = arith.truncf %33 : vector<8x32xf32> to vector<8x32xbf16>
    %cst_18 = arith.constant dense<0.000000e+00> : vector<8x128xf32>
    %38 = tpu.matmul %37, %26, %cst_18 {dimension_numbers = #tpu.dot_dimension_numbers<[1], [0], [0], [1], [0, 0, 1, 1], [], []>} : vector<8x32xbf16>, vector<32x128xbf16>, vector<8x128xf32> -> vector<8x128xf32>
    %39 = arith.addf %36, %38 : vector<8x128xf32>
    %40 = vector.extract_strided_slice %39 {offsets = [0, 0], sizes = [8, 32], strides = [1, 1]} : vector<8x128xf32> to vector<8x32xf32>
    %41 = arith.negf %40 : vector<8x32xf32>
    %42 = math.exp %41 : vector<8x32xf32>
    %cst_19 = arith.constant 1.000000e+00 : f32
    %43 = vector.broadcast %cst_19 : f32 to vector<8x32xf32>
    %44 = arith.addf %43, %42 : vector<8x32xf32>
    %45 = arith.divf %43, %44 : vector<8x32xf32>
    %46 = vector.extract_strided_slice %39 {offsets = [0, 32], sizes = [8, 32], strides = [1, 1]} : vector<8x128xf32> to vector<8x32xf32>
    %47 = arith.negf %46 : vector<8x32xf32>
    %48 = math.exp %47 : vector<8x32xf32>
    %cst_20 = arith.constant 1.000000e+00 : f32
    %49 = vector.broadcast %cst_20 : f32 to vector<8x32xf32>
    %50 = arith.addf %49, %48 : vector<8x32xf32>
    %51 = arith.divf %49, %50 : vector<8x32xf32>
    %52 = vector.extract_strided_slice %39 {offsets = [0, 64], sizes = [8, 32], strides = [1, 1]} : vector<8x128xf32> to vector<8x32xf32>
    %53 = math.tanh %52 : vector<8x32xf32>
    %54 = vector.extract_strided_slice %39 {offsets = [0, 96], sizes = [8, 32], strides = [1, 1]} : vector<8x128xf32> to vector<8x32xf32>
    %55 = arith.negf %54 : vector<8x32xf32>
    %56 = math.exp %55 : vector<8x32xf32>
    %cst_21 = arith.constant 1.000000e+00 : f32
    %57 = vector.broadcast %cst_21 : f32 to vector<8x32xf32>
    %58 = arith.addf %57, %56 : vector<8x32xf32>
    %59 = arith.divf %57, %58 : vector<8x32xf32>
    %60 = arith.mulf %51, %34 : vector<8x32xf32>
    %61 = arith.mulf %45, %53 : vector<8x32xf32>
    %62 = arith.addf %60, %61 : vector<8x32xf32>
    %63 = math.tanh %62 : vector<8x32xf32>
    %64 = arith.mulf %59, %63 : vector<8x32xf32>
    %65 = vector.extract_strided_slice %32 {offsets = [1, 0, 0], sizes = [1, 8, 128], strides = [1, 1, 1]} : vector<4x8x128xf32> to vector<1x8x128xf32>
    %66 = vector.shape_cast %65 : vector<1x8x128xf32> to vector<8x128xf32>
    %67 = arith.truncf %64 : vector<8x32xf32> to vector<8x32xbf16>
    %cst_22 = arith.constant dense<0.000000e+00> : vector<8x128xf32>
    %68 = tpu.matmul %67, %26, %cst_22 {dimension_numbers = #tpu.dot_dimension_numbers<[1], [0], [0], [1], [0, 0, 1, 1], [], []>} : vector<8x32xbf16>, vector<32x128xbf16>, vector<8x128xf32> -> vector<8x128xf32>
    %69 = arith.addf %66, %68 : vector<8x128xf32>
    %70 = vector.extract_strided_slice %69 {offsets = [0, 0], sizes = [8, 32], strides = [1, 1]} : vector<8x128xf32> to vector<8x32xf32>
    %71 = arith.negf %70 : vector<8x32xf32>
    %72 = math.exp %71 : vector<8x32xf32>
    %cst_23 = arith.constant 1.000000e+00 : f32
    %73 = vector.broadcast %cst_23 : f32 to vector<8x32xf32>
    %74 = arith.addf %73, %72 : vector<8x32xf32>
    %75 = arith.divf %73, %74 : vector<8x32xf32>
    %76 = vector.extract_strided_slice %69 {offsets = [0, 32], sizes = [8, 32], strides = [1, 1]} : vector<8x128xf32> to vector<8x32xf32>
    %77 = arith.negf %76 : vector<8x32xf32>
    %78 = math.exp %77 : vector<8x32xf32>
    %cst_24 = arith.constant 1.000000e+00 : f32
    %79 = vector.broadcast %cst_24 : f32 to vector<8x32xf32>
    %80 = arith.addf %79, %78 : vector<8x32xf32>
    %81 = arith.divf %79, %80 : vector<8x32xf32>
    %82 = vector.extract_strided_slice %69 {offsets = [0, 64], sizes = [8, 32], strides = [1, 1]} : vector<8x128xf32> to vector<8x32xf32>
    %83 = math.tanh %82 : vector<8x32xf32>
    %84 = vector.extract_strided_slice %69 {offsets = [0, 96], sizes = [8, 32], strides = [1, 1]} : vector<8x128xf32> to vector<8x32xf32>
    %85 = arith.negf %84 : vector<8x32xf32>
    %86 = math.exp %85 : vector<8x32xf32>
    %cst_25 = arith.constant 1.000000e+00 : f32
    %87 = vector.broadcast %cst_25 : f32 to vector<8x32xf32>
    %88 = arith.addf %87, %86 : vector<8x32xf32>
    %89 = arith.divf %87, %88 : vector<8x32xf32>
    %90 = arith.mulf %81, %62 : vector<8x32xf32>
    %91 = arith.mulf %75, %83 : vector<8x32xf32>
    %92 = arith.addf %90, %91 : vector<8x32xf32>
    %93 = math.tanh %92 : vector<8x32xf32>
    %94 = arith.mulf %89, %93 : vector<8x32xf32>
    %95 = vector.extract_strided_slice %32 {offsets = [2, 0, 0], sizes = [1, 8, 128], strides = [1, 1, 1]} : vector<4x8x128xf32> to vector<1x8x128xf32>
    %96 = vector.shape_cast %95 : vector<1x8x128xf32> to vector<8x128xf32>
    %97 = arith.truncf %94 : vector<8x32xf32> to vector<8x32xbf16>
    %cst_26 = arith.constant dense<0.000000e+00> : vector<8x128xf32>
    %98 = tpu.matmul %97, %26, %cst_26 {dimension_numbers = #tpu.dot_dimension_numbers<[1], [0], [0], [1], [0, 0, 1, 1], [], []>} : vector<8x32xbf16>, vector<32x128xbf16>, vector<8x128xf32> -> vector<8x128xf32>
    %99 = arith.addf %96, %98 : vector<8x128xf32>
    %100 = vector.extract_strided_slice %99 {offsets = [0, 0], sizes = [8, 32], strides = [1, 1]} : vector<8x128xf32> to vector<8x32xf32>
    %101 = arith.negf %100 : vector<8x32xf32>
    %102 = math.exp %101 : vector<8x32xf32>
    %cst_27 = arith.constant 1.000000e+00 : f32
    %103 = vector.broadcast %cst_27 : f32 to vector<8x32xf32>
    %104 = arith.addf %103, %102 : vector<8x32xf32>
    %105 = arith.divf %103, %104 : vector<8x32xf32>
    %106 = vector.extract_strided_slice %99 {offsets = [0, 32], sizes = [8, 32], strides = [1, 1]} : vector<8x128xf32> to vector<8x32xf32>
    %107 = arith.negf %106 : vector<8x32xf32>
    %108 = math.exp %107 : vector<8x32xf32>
    %cst_28 = arith.constant 1.000000e+00 : f32
    %109 = vector.broadcast %cst_28 : f32 to vector<8x32xf32>
    %110 = arith.addf %109, %108 : vector<8x32xf32>
    %111 = arith.divf %109, %110 : vector<8x32xf32>
    %112 = vector.extract_strided_slice %99 {offsets = [0, 64], sizes = [8, 32], strides = [1, 1]} : vector<8x128xf32> to vector<8x32xf32>
    %113 = math.tanh %112 : vector<8x32xf32>
    %114 = vector.extract_strided_slice %99 {offsets = [0, 96], sizes = [8, 32], strides = [1, 1]} : vector<8x128xf32> to vector<8x32xf32>
    %115 = arith.negf %114 : vector<8x32xf32>
    %116 = math.exp %115 : vector<8x32xf32>
    %cst_29 = arith.constant 1.000000e+00 : f32
    %117 = vector.broadcast %cst_29 : f32 to vector<8x32xf32>
    %118 = arith.addf %117, %116 : vector<8x32xf32>
    %119 = arith.divf %117, %118 : vector<8x32xf32>
    %120 = arith.mulf %111, %92 : vector<8x32xf32>
    %121 = arith.mulf %105, %113 : vector<8x32xf32>
    %122 = arith.addf %120, %121 : vector<8x32xf32>
    %123 = math.tanh %122 : vector<8x32xf32>
    %124 = arith.mulf %119, %123 : vector<8x32xf32>
    %125 = vector.extract_strided_slice %32 {offsets = [3, 0, 0], sizes = [1, 8, 128], strides = [1, 1, 1]} : vector<4x8x128xf32> to vector<1x8x128xf32>
    %126 = vector.shape_cast %125 : vector<1x8x128xf32> to vector<8x128xf32>
    %127 = arith.truncf %124 : vector<8x32xf32> to vector<8x32xbf16>
    %cst_30 = arith.constant dense<0.000000e+00> : vector<8x128xf32>
    %128 = tpu.matmul %127, %26, %cst_30 {dimension_numbers = #tpu.dot_dimension_numbers<[1], [0], [0], [1], [0, 0, 1, 1], [], []>} : vector<8x32xbf16>, vector<32x128xbf16>, vector<8x128xf32> -> vector<8x128xf32>
    %129 = arith.addf %126, %128 : vector<8x128xf32>
    %130 = vector.extract_strided_slice %129 {offsets = [0, 0], sizes = [8, 32], strides = [1, 1]} : vector<8x128xf32> to vector<8x32xf32>
    %131 = arith.negf %130 : vector<8x32xf32>
    %132 = math.exp %131 : vector<8x32xf32>
    %cst_31 = arith.constant 1.000000e+00 : f32
    %133 = vector.broadcast %cst_31 : f32 to vector<8x32xf32>
    %134 = arith.addf %133, %132 : vector<8x32xf32>
    %135 = arith.divf %133, %134 : vector<8x32xf32>
    %136 = vector.extract_strided_slice %129 {offsets = [0, 32], sizes = [8, 32], strides = [1, 1]} : vector<8x128xf32> to vector<8x32xf32>
    %137 = arith.negf %136 : vector<8x32xf32>
    %138 = math.exp %137 : vector<8x32xf32>
    %cst_32 = arith.constant 1.000000e+00 : f32
    %139 = vector.broadcast %cst_32 : f32 to vector<8x32xf32>
    %140 = arith.addf %139, %138 : vector<8x32xf32>
    %141 = arith.divf %139, %140 : vector<8x32xf32>
    %142 = vector.extract_strided_slice %129 {offsets = [0, 64], sizes = [8, 32], strides = [1, 1]} : vector<8x128xf32> to vector<8x32xf32>
    %143 = math.tanh %142 : vector<8x32xf32>
    %144 = vector.extract_strided_slice %129 {offsets = [0, 96], sizes = [8, 32], strides = [1, 1]} : vector<8x128xf32> to vector<8x32xf32>
    %145 = arith.negf %144 : vector<8x32xf32>
    %146 = math.exp %145 : vector<8x32xf32>
    %cst_33 = arith.constant 1.000000e+00 : f32
    %147 = vector.broadcast %cst_33 : f32 to vector<8x32xf32>
    %148 = arith.addf %147, %146 : vector<8x32xf32>
    %149 = arith.divf %147, %148 : vector<8x32xf32>
    %150 = arith.mulf %141, %122 : vector<8x32xf32>
    %151 = arith.mulf %135, %143 : vector<8x32xf32>
    %152 = arith.addf %150, %151 : vector<8x32xf32>
    %153 = math.tanh %152 : vector<8x32xf32>
    %154 = arith.mulf %149, %153 : vector<8x32xf32>
    %c0_34 = arith.constant 0 : index
    %c0_35 = arith.constant 0 : index
    %155 = vector.load %arg5[%c0_34, %c0_35] : memref<32x128xf32, #tpu.memory_space<vmem>>, vector<32x128xf32>
    %cst_36 = arith.constant dense<0.000000e+00> : vector<8x128xf32>
    %156 = tpu.matmul %154, %155, %cst_36 {dimension_numbers = #tpu.dot_dimension_numbers<[1], [0], [0], [1], [0, 0, 1, 1], [], []>} : vector<8x32xf32>, vector<32x128xf32>, vector<8x128xf32> -> vector<8x128xf32>
    %c0_37 = arith.constant 0 : index
    %c0_38 = arith.constant 0 : index
    %157 = vector.load %arg6[%c0_37, %c0_38] : memref<1x128xf32, #tpu.memory_space<vmem>>, vector<1x128xf32>
    %158 = vector.broadcast %157 : vector<1x128xf32> to vector<8x128xf32>
    %159 = arith.addf %156, %158 : vector<8x128xf32>
    %c0_39 = arith.constant 0 : index
    %c0_40 = arith.constant 0 : index
    %160 = vector.load %arg7[%c0_39, %c0_40] : memref<8x128xf32, #tpu.memory_space<vmem>>, vector<8x128xf32>
    tpu.vector_store %arg7[%c0_39, %c0_40], %159 {strides = array<i32>} : memref<8x128xf32, #tpu.memory_space<vmem>>, vector<8x128xf32>,
    return
  }
}

</mosaic_0001>

<llo_original>
// kernel: tpu_custom_call.1
$region0: #{tpu_custom_call.1}
  #allocation0 [shape = 'u32[]', space=smem, size = 0x4, offset = 0x4, fixed_abs, tag = 'smem constant byte address 0x4 - core index']
  #allocation1 [shape = 'u32[144,128]{1,0:T(1,128)}', space=vmem, size = 0x12000, scoped, tag = 'internal scratch']
  %s0 = inlined_call_operand.hbm [shape: f32[4,8,16], index: 0, kind: input, shape index: {}]
  %s1 = inlined_call_operand.vmem [shape: f32[2,16], index: 1, kind: input, shape index: {}]
  %s2 = inlined_call_operand.hbm [shape: bf16[16,128], index: 2, kind: input, shape index: {}]
  %s3 = inlined_call_operand.hbm [shape: bf16[32,128], index: 3, kind: input, shape index: {}]
  %s4 = inlined_call_operand.vmem [shape: f32[1,128], index: 4, kind: input, shape index: {}]
  %s5 = inlined_call_operand.hbm [shape: f32[32,128], index: 5, kind: input, shape index: {}]
  %s6 = inlined_call_operand.vmem [shape: f32[1,128], index: 6, kind: input, shape index: {}]
  %s7 = inlined_call_operand.hbm [shape: f32[8,128], index: 7, kind: output, shape index: {}]
  %s8 = sld [smem:[#allocation0]]
  $region54: #{tpu_custom_call.1} parent=0
    _
  %s10 = ssub.s32 1, %s8
  %s11 = scalar_select 0, %s10, %s8
  $region1: #{tpu_custom_call.1} parent=0
    #allocation2 [shape = 'u8[16384]{0}', space=vmem, size = 0x4000, scoped, tag = 'input window, operand 0, single buffered']
    #allocation3 [shape = 's32[1]{0}', space=sflag, size = 0x4, scoped, tag = 'scoped memory for tpu_custom_call.1']
    #allocation4 [shape = 's32[1]{0}', space=sflag, size = 0x4, scoped, tag = 'scoped memory for tpu_custom_call.1']
    #allocation5 [shape = 'u8[4096]{0}', space=vmem, size = 0x1000, scoped, tag = 'input window, operand 2, single buffered']
    #allocation6 [shape = 's32[1]{0}', space=sflag, size = 0x4, scoped, tag = 'scoped memory for tpu_custom_call.1']
    #allocation7 [shape = 'u8[8192]{0}', space=vmem, size = 0x2000, scoped, tag = 'input window, operand 3, single buffered']
    #allocation8 [shape = 'u8[16384]{0}', space=vmem, size = 0x4000, scoped, tag = 'input window, operand 5, single buffered']
    #allocation9 [shape = 's32[1]{0}', space=sflag, size = 0x4, scoped, tag = 'scoped memory for tpu_custom_call.1']
    #allocation10 [shape = 'u8[4096]{0}', space=vmem, size = 0x1000, scoped, tag = 'output window, operand 0, single buffered']
    %12 = vsyncpa [#allocation3], 0
    %13 = vsyncpa [#allocation6], 0
    %14 = vsyncpa [#allocation9], 0
    %15 = vsyncpa [#allocation4], 0
    // Predicated region
    $region2: #{tpu_custom_call.1} parent=1 // pred_check
      _
    $region3: #{tpu_custom_call.1} parent=1 // pred_check_branch
      %17 = sbr.rel (0) target = $region5
    $region4: #{tpu_custom_call.1} parent=1 // pred_region
      %s19 = ssub.s32 512, 512
      %20 = vsyncadd [#allocation3], %s19
      %s21 = sshll.u32 [#allocation2], 4
      %s22 = int_to_ptr.vmem [resolvable:$true] %s21
      %27 = dma.hbm_to_vmem [thread:$0]  %s0, 512, %s22, [#allocation3], 128, 128, 8
    $region5: #{tpu_custom_call.1} parent=1 // pred_fallthru
      _
    // Predicated region
    $region6: #{tpu_custom_call.1} parent=1 // pred_check
      _
    $region7: #{tpu_custom_call.1} parent=1 // pred_check_branch
      %29 = sbr.rel (0) target = $region9
    $region8: #{tpu_custom_call.1} parent=1 // pred_region
      _
    $region9: #{tpu_custom_call.1} parent=1 // pred_fallthru
      _
    // Predicated region
    $region10: #{tpu_custom_call.1} parent=1 // pred_check
      _
    $region11: #{tpu_custom_call.1} parent=1 // pred_check_branch
      %31 = sbr.rel (0) target = $region13
    $region12: #{tpu_custom_call.1} parent=1 // pred_region
      %s33 = ssub.s32 128, 128
      %34 = vsyncadd [#allocation6], %s33
      %s35 = sshll.u32 [#allocation5], 4
      %s36 = int_to_ptr.vmem [resolvable:$true] %s35
      %41 = dma.hbm_to_vmem [thread:$0]  %s2, 128, %s36, [#allocation6], 64, 64, 4
    $region13: #{tpu_custom_call.1} parent=1 // pred_fallthru
      _
    // Predicated region
    $region14: #{tpu_custom_call.1} parent=1 // pred_check
      _
    $region15: #{tpu_custom_call.1} parent=1 // pred_check_branch
      %43 = sbr.rel (0) target = $region17
    $region16: #{tpu_custom_call.1} parent=1 // pred_region
      %s45 = ssub.s32 256, 256
      %46 = vsyncadd [#allocation6], %s45
      %s47 = sshll.u32 [#allocation7], 4
      %s48 = int_to_ptr.vmem [resolvable:$true] %s47
      %53 = dma.hbm_to_vmem [thread:$0]  %s3, 256, %s48, [#allocation6], 64, 64, 4
    $region17: #{tpu_custom_call.1} parent=1 // pred_fallthru
      _
    // Predicated region
    $region18: #{tpu_custom_call.1} parent=1 // pred_check
      _
    $region19: #{tpu_custom_call.1} parent=1 // pred_check_branch
      %55 = sbr.rel (0) target = $region21
    $region20: #{tpu_custom_call.1} parent=1 // pred_region
      _
    $region21: #{tpu_custom_call.1} parent=1 // pred_fallthru
      _
    // Predicated region
    $region22: #{tpu_custom_call.1} parent=1 // pred_check
      _
    $region23: #{tpu_custom_call.1} parent=1 // pred_check_branch
      %57 = sbr.rel (0) target = $region25
    $region24: #{tpu_custom_call.1} parent=1 // pred_region
      %s59 = ssub.s32 512, 512
      %60 = vsyncadd [#allocation9], %s59
      %s61 = sshll.u32 [#allocation8], 4
      %s62 = int_to_ptr.vmem [resolvable:$true] %s61
      %67 = dma.hbm_to_vmem [thread:$0]  %s5, 512, %s62, [#allocation9], 128, 128, 8
    $region25: #{tpu_custom_call.1} parent=1 // pred_fallthru
      _
    // Predicated region
    $region26: #{tpu_custom_call.1} parent=1 // pred_check
      _
    $region27: #{tpu_custom_call.1} parent=1 // pred_check_branch
      %69 = sbr.rel (0) target = $region29
    $region28: #{tpu_custom_call.1} parent=1 // pred_region
      _
    $region29: #{tpu_custom_call.1} parent=1 // pred_fallthru
      _
    // Predicated region
    $region30: #{tpu_custom_call.1} parent=1 // pred_check
      _
    $region31: #{tpu_custom_call.1} parent=1 // pred_check_branch
      %71 = sbr.rel (0) target = $region33
    $region32: #{tpu_custom_call.1} parent=1 // pred_region
      %72 = dma.done [#allocation3], 512
    $region33: #{tpu_custom_call.1} parent=1 // pred_fallthru
      _
    // Predicated region
    $region34: #{tpu_custom_call.1} parent=1 // pred_check
      _
    $region35: #{tpu_custom_call.1} parent=1 // pred_check_branch
      %74 = sbr.rel (0) target = $region37
    $region36: #{tpu_custom_call.1} parent=1 // pred_region
      %75 = dma.done [#allocation6], 128
    $region37: #{tpu_custom_call.1} parent=1 // pred_fallthru
      _
    // Predicated region
    $region38: #{tpu_custom_call.1} parent=1 // pred_check
      _
    $region39: #{tpu_custom_call.1} parent=1 // pred_check_branch
      %77 = sbr.rel (0) target = $region41
    $region40: #{tpu_custom_call.1} parent=1 // pred_region
      %78 = dma.done [#allocation6], 256
    $region41: #{tpu_custom_call.1} parent=1 // pred_fallthru
      _
    // Predicated region
    $region42: #{tpu_custom_call.1} parent=1 // pred_check
      _
    $region43: #{tpu_custom_call.1} parent=1 // pred_check_branch
      %80 = sbr.rel (0) target = $region45
    $region44: #{tpu_custom_call.1} parent=1 // pred_region
      %81 = dma.done [#allocation9], 512
    $region45: #{tpu_custom_call.1} parent=1 // pred_fallthru
      _
    %v83 = vld [vmem:[#allocation2] sm:$0xff]
    %v84 = vld [vmem:[#allocation2 + $0x8] sm:$0xff]
    %v85 = vld [vmem:[#allocation2 + $0x10] sm:$0xff]
    %v86 = vld [vmem:[#allocation2 + $0x18] sm:$0xff]
    %vm87 = vcmask 130048
    %v88 = vsel %vm87, %v83, 0.0
    %v89 = vsel %vm87, %v84, 0.0
    %v90 = vadd.f32 %v88, %v89
    %v91 = vsel %vm87, %v85, 0.0
    %v92 = vadd.f32 %v90, %v91
    %v93 = vsel %vm87, %v86, 0.0
    %v94 = vadd.f32 %v92, %v93
    %v95 = vrot.slane %v94, 4
    %v96 = vadd.f32 %v94, %v95
    %v97 = vrot.slane %v96, 2
    %v98 = vadd.f32 %v96, %v97
    %v99 = vrot.slane %v98, 1
    %v100 = vadd.f32 %v98, %v99
    %v101 = vmul.f32 %v83, %v83
    %v102 = vmul.f32 %v84, %v84
    %v103 = vmul.f32 %v85, %v85
    %v104 = vmul.f32 %v86, %v86
    %v105 = vsel %vm87, %v101, 0.0
    %v106 = vsel %vm87, %v102, 0.0
    %v107 = vadd.f32 %v105, %v106
    %v108 = vsel %vm87, %v103, 0.0
    %v109 = vadd.f32 %v107, %v108
    %v110 = vsel %vm87, %v104, 0.0
    %v111 = vadd.f32 %v109, %v110
    %v112 = vrot.slane %v111, 4
    %v113 = vadd.f32 %v111, %v112
    %v114 = vrot.slane %v113, 2
    %v115 = vadd.f32 %v113, %v114
    %v116 = vrot.slane %v115, 1
    %v117 = vadd.f32 %v115, %v116
    %v118 = vmul.f32 %v100, 0.03125
    %v119 = vmul.f32 %v117, 0.03125
    %v120 = vmul.f32 %v118, %v118
    %v121 = vsub.f32 %v119, %v120
    %v122 = vld [vmem:[%s1] sm:$0x1]
    %v123 = vld [vmem:[%s1 + $0x1] sm:$0x1]
    %v124 = vadd.f32 %v121, 1e-05
    %v125 = vrsqrt.pop %v124
    %v126 = vmul.f32 %v122, %v125
    %v127 = vmul.f32 %v118, %v126
    %v128 = vsub.f32 %v123, %v127
    %v129 = vlaneseq
    %v130 = vshrl.u32 %v129, 7
    %v131 = vsub.s32 0, %v130
    %v132 = vrot.slane %v126, %v131
    %v133 = vmul.f32 %v83, %v132
    %v134 = vmul.f32 %v84, %v132
    %v135 = vmul.f32 %v85, %v132
    %v136 = vmul.f32 %v86, %v132
    %v137 = vlaneseq
    %v138 = vshrl.u32 %v137, 7
    %v139 = vsub.s32 0, %v138
    %v140 = vrot.slane %v128, %v139
    %v141 = vadd.f32 %v133, %v140
    %v142 = vadd.f32 %v134, %v140
    %v143 = vadd.f32 %v135, %v140
    %v144 = vadd.f32 %v136, %v140
    %v145 = vld [vmem:[#allocation5] sm:$0xf]
    %v146 = vld [vmem:[#allocation5 + $0x4] sm:$0xf]
    %v147 = vld [vmem:[#allocation7] sm:$0xf]
    %v148 = vld [vmem:[#allocation7 + $0x4] sm:$0xf]
    %v149 = vld [vmem:[#allocation7 + $0x8] sm:$0xf]
    %v150 = vld [vmem:[#allocation7 + $0xc] sm:$0xf]
    %v151 = vld [vmem:[%s4] sm:$0x1]
    %v152 = vpack.c.bf16 %v142, %v141
    %v153 = vpack.c.bf16 %v144, %v143
    %v155 = vlaneseq
    %v156 = vshrl.u32 %v155, 7
    %v157 = vsub.s32 0, %v156
    %v158 = vrot.slane %v151, %v157
    %v162 = vunpack.c.l.b16 %v145
    %v163 = vunpack.c.l.b16 %v146
    %v164 = vpack.c.b16 %v163, %v162
    %v167 = vsel %vm87, %v152, 0
    %v170 = vsel %vm87, %v153, 0
    %172 = vmatprep.subr.bf16.mxu0 0
    %173 = vmatpush1.bf16.msra.mxu0 %v164
    %174 = vmatprep.subr.bf16.mxu0 0
    %175 = vmatpush1.bf16.msra.mxu0 0
    %176 = vmatprep.subr.bf16.mxu0 0
    %177 = vmatpush1.bf16.msra.mxu0 0
    %178 = vmatprep.subr.bf16.mxu0 0
    %179 = vmatpush1.bf16.msra.mxu0 0
    %180 = vmatprep.subr.bf16.mxu0 0
    %181 = vmatpush1.bf16.msra.mxu0 0
    %182 = vmatprep.subr.bf16.mxu0 0
    %183 = vmatpush1.bf16.msra.mxu0 0
    %184 = vmatprep.subr.bf16.mxu0 0
    %185 = vmatpush1.bf16.msra.mxu0 0
    %186 = vmatprep.subr.bf16.mxu0 0
    %187 = vmatpush1.bf16.msra.mxu0 0
    %188 = vmatprep.subr.bf16.mxu0 0
    %189 = vmatpush1.bf16.msra.mxu0 0
    %190 = vmatprep.subr.bf16.mxu0 0
    %191 = vmatpush1.bf16.msra.mxu0 0
    %192 = vmatprep.subr.bf16.mxu0 0
    %193 = vmatpush1.bf16.msra.mxu0 0
    %194 = vmatprep.subr.bf16.mxu0 0
    %195 = vmatpush1.bf16.msra.mxu0 0
    %196 = vmatprep.subr.bf16.mxu0 0
    %197 = vmatpush1.bf16.msra.mxu0 0
    %198 = vmatprep.subr.bf16.mxu0 0
    %199 = vmatpush1.bf16.msra.mxu0 0
    %200 = vmatprep.subr.bf16.mxu0 0
    %201 = vmatpush1.bf16.msra.mxu0 0
    %202 = vmatprep.subr.bf16.mxu0 0
    %203 = vmatpush1.bf16.msra.mxu0 0
    %204 = vmatprep.mubr.bf16.mxu0 0
    %205 = vmatmul.mubr.bf16.gmra.mrb[0].mxu0 %v167
    %v206 = vpop.f32.mrb[0].mxu0
    %v207 = vadd.f32 %v158, %v206
    %v208 = vpop.f32.mrb[0].mxu0
    %v209 = vpop.f32.mrb[0].mxu0
    %v210 = vadd.f32 %v158, %v209
    %v211 = vpop.f32.mrb[0].mxu0
    %212 = vmatprep.mubr.bf16.mxu0 0
    %213 = vmatmul.mubr.bf16.gmra.mrb[0].mxu0 %v170
    %v214 = vpop.f32.mrb[0].mxu0
    %v215 = vadd.f32 %v158, %v214
    %v216 = vpop.f32.mrb[0].mxu0
    %v217 = vpop.f32.mrb[0].mxu0
    %v218 = vadd.f32 %v158, %v217
    %v219 = vpop.f32.mrb[0].mxu0
    %220 = vdwg.mxu0
    %v225 = vunpack.c.l.b16 %v147
    %v226 = vunpack.c.l.b16 %v148
    %v227 = vunpack.c.l.b16 %v149
    %v228 = vunpack.c.l.b16 %v150
    %v229 = vpack.c.b16 %v226, %v225
    %v230 = vpack.c.b16 %v228, %v227
    %vm233 = vcmask 261120
    %v235 = vsel %vm233, 0, 0
    %237 = vmatprep.subr.bf16.mxu0 0
    %238 = vmatpush1.bf16.msra.mxu0 %v229
    %239 = vmatprep.subr.bf16.mxu0 0
    %240 = vmatpush1.bf16.msra.mxu0 %v230
    %241 = vmatprep.subr.bf16.mxu0 0
    %242 = vmatpush1.bf16.msra.mxu0 0
    %243 = vmatprep.subr.bf16.mxu0 0
    %244 = vmatpush1.bf16.msra.mxu0 0
    %245 = vmatprep.subr.bf16.mxu0 0
    %246 = vmatpush1.bf16.msra.mxu0 0
    %247 = vmatprep.subr.bf16.mxu0 0
    %248 = vmatpush1.bf16.msra.mxu0 0
    %249 = vmatprep.subr.bf16.mxu0 0
    %250 = vmatpush1.bf16.msra.mxu0 0
    %251 = vmatprep.subr.bf16.mxu0 0
    %252 = vmatpush1.bf16.msra.mxu0 0
    %253 = vmatprep.subr.bf16.mxu0 0
    %254 = vmatpush1.bf16.msra.mxu0 0
    %255 = vmatprep.subr.bf16.mxu0 0
    %256 = vmatpush1.bf16.msra.mxu0 0
    %257 = vmatprep.subr.bf16.mxu0 0
    %258 = vmatpush1.bf16.msra.mxu0 0
    %259 = vmatprep.subr.bf16.mxu0 0
    %260 = vmatpush1.bf16.msra.mxu0 0
    %261 = vmatprep.subr.bf16.mxu0 0
    %262 = vmatpush1.bf16.msra.mxu0 0
    %263 = vmatprep.subr.bf16.mxu0 0
    %264 = vmatpush1.bf16.msra.mxu0 0
    %265 = vmatprep.subr.bf16.mxu0 0
    %266 = vmatpush1.bf16.msra.mxu0 0
    %267 = vmatprep.subr.bf16.mxu0 0
    %268 = vmatpush1.bf16.msra.mxu0 0
    %269 = vmatprep.mubr.bf16.mxu0 0
    %270 = vmatmul.mubr.bf16.gmra.mrb[0].mxu0 %v235
    %v271 = vpop.f32.mrb[0].mxu0
    %v272 = vadd.f32 0.0, %v271
    %v273 = vpop.f32.mrb[0].mxu0
    %v274 = vpop.f32.mrb[0].mxu0
    %v275 = vpop.f32.mrb[0].mxu0
    %276 = vdwg.mxu0
    %v277 = vadd.f32 %v207, %v272
    %v278 = vxor.u32 %v277, 2147483648
    %v279 = vmul.f32 %v278, 1.442695
    %v280 = vpow.pop %v279
    %v281 = vadd.f32 %v280, 1.0
    %v282 = vrcp.pop %v281
    %v283 = vmul.f32 1.0, %v282
    %v284 = vtanh.pop %v277
    %v285 = vmul.f32 %v283, 0.0
    %287 = vrot.lane.b32.xlu0 %v284, 64
    %v288 = vpop.permute.xlu0 %287
    %v290 = vmul.f32 %v283, %v288
    %292 = vrot.lane.b32.xlu0 %v290, 32
    %v293 = vpop.permute.xlu0 %292
    %v295 = vadd.f32 %v285, %v293
    %v296 = vtanh.pop %v295
    %298 = vrot.lane.b32.xlu0 %v296, 64
    %v299 = vpop.permute.xlu0 %298
    %v301 = vmul.f32 %v283, %v299
    %v302 = vpack.c.bf16 %v301, %v301
    %304 = vrot.lane.b32.xlu0 %v302, 32
    %v305 = vpop.permute.xlu0 %304
    %v307 = vsel %vm233, %v305, 0
    %309 = vmatprep.subr.bf16.mxu0 0
    %310 = vmatpush1.bf16.msra.mxu0 %v229
    %311 = vmatprep.subr.bf16.mxu0 0
    %312 = vmatpush1.bf16.msra.mxu0 %v230
    %313 = vmatprep.subr.bf16.mxu0 0
    %314 = vmatpush1.bf16.msra.mxu0 0
    %315 = vmatprep.subr.bf16.mxu0 0
    %316 = vmatpush1.bf16.msra.mxu0 0
    %317 = vmatprep.subr.bf16.mxu0 0
    %318 = vmatpush1.bf16.msra.mxu0 0
    %319 = vmatprep.subr.bf16.mxu0 0
    %320 = vmatpush1.bf16.msra.mxu0 0
    %321 = vmatprep.subr.bf16.mxu0 0
    %322 = vmatpush1.bf16.msra.mxu0 0
    %323 = vmatprep.subr.bf16.mxu0 0
    %324 = vmatpush1.bf16.msra.mxu0 0
    %325 = vmatprep.subr.bf16.mxu0 0
    %326 = vmatpush1.bf16.msra.mxu0 0
    %327 = vmatprep.subr.bf16.mxu0 0
    %328 = vmatpush1.bf16.msra.mxu0 0
    %329 = vmatprep.subr.bf16.mxu0 0
    %330 = vmatpush1.bf16.msra.mxu0 0
    %331 = vmatprep.subr.bf16.mxu0 0
    %332 = vmatpush1.bf16.msra.mxu0 0
    %333 = vmatprep.subr.bf16.mxu0 0
    %334 = vmatpush1.bf16.msra.mxu0 0
    %335 = vmatprep.subr.bf16.mxu0 0
    %336 = vmatpush1.bf16.msra.mxu0 0
    %337 = vmatprep.subr.bf16.mxu0 0
    %338 = vmatpush1.bf16.msra.mxu0 0
    %339 = vmatprep.subr.bf16.mxu0 0
    %340 = vmatpush1.bf16.msra.mxu0 0
    %341 = vmatprep.mubr.bf16.mxu0 0
    %342 = vmatmul.mubr.bf16.gmra.mrb[0].mxu0 %v307
    %v343 = vpop.f32.mrb[0].mxu0
    %v344 = vadd.f32 0.0, %v343
    %v345 = vpop.f32.mrb[0].mxu0
    %v346 = vpop.f32.mrb[0].mxu0
    %v347 = vpop.f32.mrb[0].mxu0
    %348 = vdwg.mxu0
    %v349 = vadd.f32 %v210, %v344
    %v350 = vxor.u32 %v349, 2147483648
    %v351 = vmul.f32 %v350, 1.442695
    %v352 = vpow.pop %v351
    %v353 = vadd.f32 %v352, 1.0
    %v354 = vrcp.pop %v353
    %v355 = vmul.f32 1.0, %v354
    %v356 = vtanh.pop %v349
    %v357 = vmul.f32 %v355, %v295
    %359 = vrot.lane.b32.xlu0 %v356, 64
    %v360 = vpop.permute.xlu0 %359
    %v362 = vmul.f32 %v355, %v360
    %364 = vrot.lane.b32.xlu0 %v362, 32
    %v365 = vpop.permute.xlu0 %364
    %v367 = vadd.f32 %v357, %v365
    %v368 = vtanh.pop %v367
    %370 = vrot.lane.b32.xlu0 %v368, 64
    %v371 = vpop.permute.xlu0 %370
    %v373 = vmul.f32 %v355, %v371
    %v374 = vpack.c.bf16 %v373, %v373
    %376 = vrot.lane.b32.xlu0 %v374, 32
    %v377 = vpop.permute.xlu0 %376
    %v379 = vsel %vm233, %v377, 0
    %381 = vmatprep.subr.bf16.mxu0 0
    %382 = vmatpush1.bf16.msra.mxu0 %v229
    %383 = vmatprep.subr.bf16.mxu0 0
    %384 = vmatpush1.bf16.msra.mxu0 %v230
    %385 = vmatprep.subr.bf16.mxu0 0
    %386 = vmatpush1.bf16.msra.mxu0 0
    %387 = vmatprep.subr.bf16.mxu0 0
    %388 = vmatpush1.bf16.msra.mxu0 0
    %389 = vmatprep.subr.bf16.mxu0 0
    %390 = vmatpush1.bf16.msra.mxu0 0
    %391 = vmatprep.subr.bf16.mxu0 0
    %392 = vmatpush1.bf16.msra.mxu0 0
    %393 = vmatprep.subr.bf16.mxu0 0
    %394 = vmatpush1.bf16.msra.mxu0 0
    %395 = vmatprep.subr.bf16.mxu0 0
    %396 = vmatpush1.bf16.msra.mxu0 0
    %397 = vmatprep.subr.bf16.mxu0 0
    %398 = vmatpush1.bf16.msra.mxu0 0
    %399 = vmatprep.subr.bf16.mxu0 0
    %400 = vmatpush1.bf16.msra.mxu0 0
    %401 = vmatprep.subr.bf16.mxu0 0
    %402 = vmatpush1.bf16.msra.mxu0 0
    %403 = vmatprep.subr.bf16.mxu0 0
    %404 = vmatpush1.bf16.msra.mxu0 0
    %405 = vmatprep.subr.bf16.mxu0 0
    %406 = vmatpush1.bf16.msra.mxu0 0
    %407 = vmatprep.subr.bf16.mxu0 0
    %408 = vmatpush1.bf16.msra.mxu0 0
    %409 = vmatprep.subr.bf16.mxu0 0
    %410 = vmatpush1.bf16.msra.mxu0 0
    %411 = vmatprep.subr.bf16.mxu0 0
    %412 = vmatpush1.bf16.msra.mxu0 0
    %413 = vmatprep.mubr.bf16.mxu0 0
    %414 = vmatmul.mubr.bf16.gmra.mrb[0].mxu0 %v379
    %v415 = vpop.f32.mrb[0].mxu0
    %v416 = vadd.f32 0.0, %v415
    %v417 = vpop.f32.mrb[0].mxu0
    %v418 = vpop.f32.mrb[0].mxu0
    %v419 = vpop.f32.mrb[0].mxu0
    %420 = vdwg.mxu0
    %v421 = vadd.f32 %v215, %v416
    %v422 = vxor.u32 %v421, 2147483648
    %v423 = vmul.f32 %v422, 1.442695
    %v424 = vpow.pop %v423
    %v425 = vadd.f32 %v424, 1.0
    %v426 = vrcp.pop %v425
    %v427 = vmul.f32 1.0, %v426
    %v428 = vtanh.pop %v421
    %v429 = vmul.f32 %v427, %v367
    %431 = vrot.lane.b32.xlu0 %v428, 64
    %v432 = vpop.permute.xlu0 %431
    %v434 = vmul.f32 %v427, %v432
    %436 = vrot.lane.b32.xlu0 %v434, 32
    %v437 = vpop.permute.xlu0 %436
    %v439 = vadd.f32 %v429, %v437
    %v440 = vtanh.pop %v439
    %442 = vrot.lane.b32.xlu0 %v440, 64
    %v443 = vpop.permute.xlu0 %442
    %v445 = vmul.f32 %v427, %v443
    %v446 = vpack.c.bf16 %v445, %v445
    %448 = vrot.lane.b32.xlu0 %v446, 32
    %v449 = vpop.permute.xlu0 %448
    %v451 = vsel %vm233, %v449, 0
    %453 = vmatprep.subr.bf16.mxu0 0
    %454 = vmatpush1.bf16.msra.mxu0 %v229
    %455 = vmatprep.subr.bf16.mxu0 0
    %456 = vmatpush1.bf16.msra.mxu0 %v230
    %457 = vmatprep.subr.bf16.mxu0 0
    %458 = vmatpush1.bf16.msra.mxu0 0
    %459 = vmatprep.subr.bf16.mxu0 0
    %460 = vmatpush1.bf16.msra.mxu0 0
    %461 = vmatprep.subr.bf16.mxu0 0
    %462 = vmatpush1.bf16.msra.mxu0 0
    %463 = vmatprep.subr.bf16.mxu0 0
    %464 = vmatpush1.bf16.msra.mxu0 0
    %465 = vmatprep.subr.bf16.mxu0 0
    %466 = vmatpush1.bf16.msra.mxu0 0
    %467 = vmatprep.subr.bf16.mxu0 0
    %468 = vmatpush1.bf16.msra.mxu0 0
    %469 = vmatprep.subr.bf16.mxu0 0
    %470 = vmatpush1.bf16.msra.mxu0 0
    %471 = vmatprep.subr.bf16.mxu0 0
    %472 = vmatpush1.bf16.msra.mxu0 0
    %473 = vmatprep.subr.bf16.mxu0 0
    %474 = vmatpush1.bf16.msra.mxu0 0
    %475 = vmatprep.subr.bf16.mxu0 0
    %476 = vmatpush1.bf16.msra.mxu0 0
    %477 = vmatprep.subr.bf16.mxu0 0
    %478 = vmatpush1.bf16.msra.mxu0 0
    %479 = vmatprep.subr.bf16.mxu0 0
    %480 = vmatpush1.bf16.msra.mxu0 0
    %481 = vmatprep.subr.bf16.mxu0 0
    %482 = vmatpush1.bf16.msra.mxu0 0
    %483 = vmatprep.subr.bf16.mxu0 0
    %484 = vmatpush1.bf16.msra.mxu0 0
    %485 = vmatprep.mubr.bf16.mxu0 0
    %486 = vmatmul.mubr.bf16.gmra.mrb[0].mxu0 %v451
    %v487 = vpop.f32.mrb[0].mxu0
    %v488 = vadd.f32 0.0, %v487
    %v489 = vpop.f32.mrb[0].mxu0
    %v490 = vpop.f32.mrb[0].mxu0
    %v491 = vpop.f32.mrb[0].mxu0
    %492 = vdwg.mxu0
    %v493 = vadd.f32 %v218, %v488
    %v494 = vxor.u32 %v493, 2147483648
    %v495 = vmul.f32 %v494, 1.442695
    %v496 = vpow.pop %v495
    %v497 = vadd.f32 %v496, 1.0
    %v498 = vrcp.pop %v497
    %v499 = vmul.f32 1.0, %v498
    %v500 = vtanh.pop %v493
    %v501 = vmul.f32 %v499, %v439
    %503 = vrot.lane.b32.xlu0 %v500, 64
    %v504 = vpop.permute.xlu0 %503
    %v506 = vmul.f32 %v499, %v504
    %508 = vrot.lane.b32.xlu0 %v506, 32
    %v509 = vpop.permute.xlu0 %508
    %v511 = vadd.f32 %v501, %v509
    %v512 = vtanh.pop %v511
    %514 = vrot.lane.b32.xlu0 %v512, 64
    %v515 = vpop.permute.xlu0 %514
    %v517 = vmul.f32 %v499, %v515
    %v518 = vld [vmem:[#allocation8] sm:$0xff]
    %v519 = vld [vmem:[#allocation8 + $0x8] sm:$0xff]
    %v520 = vld [vmem:[#allocation8 + $0x10] sm:$0xff]
    %v521 = vld [vmem:[#allocation8 + $0x18] sm:$0xff]
    %v522 = vld [vmem:[%s6] sm:$0x1]
    %v524 = vlaneseq
    %v525 = vshrl.u32 %v524, 7
    %v526 = vsub.s32 0, %v525
    %v527 = vrot.slane %v522, %v526
    %530 = vrot.lane.b32.xlu0 %v517, 32
    %v531 = vpop.permute.xlu0 %530
    %v532 = vsel %vm233, %v531, 0
    %534 = vmatprep.subr.mxu0 0.0
    %535 = vmatpush1.msra.mxu0 %v518
    %536 = vmatprep.subr.mxu0 0.0
    %537 = vmatpush1.msra.mxu0 %v519
    %538 = vmatprep.subr.mxu0 0.0
    %539 = vmatpush1.msra.mxu0 %v520
    %540 = vmatprep.subr.mxu0 0.0
    %541 = vmatpush1.msra.mxu0 %v521
    %542 = vmatprep.subr.mxu0 0.0
    %543 = vmatpush1.msra.mxu0 0.0
    %544 = vmatprep.subr.mxu0 0.0
    %545 = vmatpush1.msra.mxu0 0.0
    %546 = vmatprep.subr.mxu0 0.0
    %547 = vmatpush1.msra.mxu0 0.0
    %548 = vmatprep.subr.mxu0 0.0
    %549 = vmatpush1.msra.mxu0 0.0
    %550 = vmatprep.subr.mxu0 0.0
    %551 = vmatpush1.msra.mxu0 0.0
    %552 = vmatprep.subr.mxu0 0.0
    %553 = vmatpush1.msra.mxu0 0.0
    %554 = vmatprep.subr.mxu0 0.0
    %555 = vmatpush1.msra.mxu0 0.0
    %556 = vmatprep.subr.mxu0 0.0
    %557 = vmatpush1.msra.mxu0 0.0
    %558 = vmatprep.subr.mxu0 0.0
    %559 = vmatpush1.msra.mxu0 0.0
    %560 = vmatprep.subr.mxu0 0.0
    %561 = vmatpush1.msra.mxu0 0.0
    %562 = vmatprep.subr.mxu0 0.0
    %563 = vmatpush1.msra.mxu0 0.0
    %564 = vmatprep.subr.mxu0 0.0
    %565 = vmatpush1.msra.mxu0 0.0
    %566 = vmatprep.subr.mxu0 0.0
    %567 = vmatpush1.msra.mxu0 0.0
    %568 = vmatprep.subr.mxu0 0.0
    %569 = vmatpush1.msra.mxu0 0.0
    %570 = vmatprep.subr.mxu0 0.0
    %571 = vmatpush1.msra.mxu0 0.0
    %572 = vmatprep.subr.mxu0 0.0
    %573 = vmatpush1.msra.mxu0 0.0
    %574 = vmatprep.subr.mxu0 0.0
    %575 = vmatpush1.msra.mxu0 0.0
    %576 = vmatprep.subr.mxu0 0.0
    %577 = vmatpush1.msra.mxu0 0.0
    %578 = vmatprep.subr.mxu0 0.0
    %579 = vmatpush1.msra.mxu0 0.0
    %580 = vmatprep.subr.mxu0 0.0
    %581 = vmatpush1.msra.mxu0 0.0
    %582 = vmatprep.subr.mxu0 0.0
    %583 = vmatpush1.msra.mxu0 0.0
    %584 = vmatprep.subr.mxu0 0.0
    %585 = vmatpush1.msra.mxu0 0.0
    %586 = vmatprep.subr.mxu0 0.0
    %587 = vmatpush1.msra.mxu0 0.0
    %588 = vmatprep.subr.mxu0 0.0
    %589 = vmatpush1.msra.mxu0 0.0
    %590 = vmatprep.subr.mxu0 0.0
    %591 = vmatpush1.msra.mxu0 0.0
    %592 = vmatprep.subr.mxu0 0.0
    %593 = vmatpush1.msra.mxu0 0.0
    %594 = vmatprep.subr.mxu0 0.0
    %595 = vmatpush1.msra.mxu0 0.0
    %596 = vmatprep.subr.mxu0 0.0
    %597 = vmatpush1.msra.mxu0 0.0
    %598 = vmatprep.mubr.f32.mxu0 0.0
    %599 = vmatmul.mubr.f32.gmra.mrb[0].mxu0 %v532
    %v600 = vpop.f32.mrb[0].mxu0
    %v601 = vadd.f32 %v527, %v600
    %v602 = vpop.f32.mrb[0].mxu0
    %603 = vdwg.mxu0
    %604 = vst [vmem:[#allocation10] sm:$0xff] %v601
    // Predicated region
    $region46: #{tpu_custom_call.1} parent=1 // pred_check
      _
    $region47: #{tpu_custom_call.1} parent=1 // pred_check_branch
      %606 = sbr.rel (0) target = $region49
    $region48: #{tpu_custom_call.1} parent=1 // pred_region
      %s608 = ssub.s32 128, 128
      %609 = vsyncadd [#allocation4], %s608
      %s611 = sshll.u32 [#allocation10], 4
      %s612 = int_to_ptr.vmem [resolvable:$true] %s611
      %614 = dma.vmem_to_hbm [thread:$0]  %s612, 128, %s7, [#allocation4]
    $region49: #{tpu_custom_call.1} parent=1 // pred_fallthru
      _
    // Predicated region
    $region50: #{tpu_custom_call.1} parent=1 // pred_check
      _
    $region51: #{tpu_custom_call.1} parent=1 // pred_check_branch
      %616 = sbr.rel (0) target = $region53
    $region52: #{tpu_custom_call.1} parent=1 // pred_region
      %617 = dma.done [#allocation4], 128
    $region53: #{tpu_custom_call.1} parent=1 // pred_fallthru
      _
    %618 = vsyncpa [#allocation3], 1
    %619 = vsyncpa [#allocation6], 1
    %620 = vsyncpa [#allocation9], 1
    %621 = vsyncpa [#allocation4], 1

</llo_original>
